<compile_context>
chip_gen: v7x
topology: tpu7x:2x2x1
jax: 0.10.0
libtpu: 0.0.40
codegen_flags: <defaults>
</compile_context>

<pallas_src>
import math
import numpy as np
import jax
import jax.numpy as jnp
from jax.experimental import pallas as pl
from jax.experimental.pallas import tpu as pltpu


def _round_up(v, m):
    return ((v + m - 1) // m) * m


# --------------------------------------------------------------------------
# Filter construction (host side) — matches
# alias_free_activation.torch.filter.kaiser_sinc_filter1d
# --------------------------------------------------------------------------
def kaiser_sinc_filter1d(cutoff, half_width, kernel_size):
    even = kernel_size % 2 == 0
    half_size = kernel_size // 2
    delta_f = 4 * half_width
    A = 2.285 * (half_size - 1) * math.pi * delta_f + 7.95
    if A > 50.0:
        beta = 0.1102 * (A - 8.7)
    elif A >= 21.0:
        beta = 0.5842 * (A - 21.0) ** 0.4 + 0.07886 * (A - 21.0)
    else:
        beta = 0.0
    n = np.arange(kernel_size, dtype=np.float64)
    arg = 1.0 - (2.0 * n / (kernel_size - 1) - 1.0) ** 2
    window = np.i0(beta * np.sqrt(np.clip(arg, 0.0, 1.0))) / np.i0(beta)
    if even:
        time = np.arange(-half_size, half_size, dtype=np.float64) + 0.5
    else:
        time = np.arange(kernel_size, dtype=np.float64) - half_size
    if cutoff == 0:
        filt = np.zeros_like(time)
    else:
        filt = 2.0 * cutoff * window * np.sinc(2.0 * cutoff * time)
        filt = filt / filt.sum()
    return filt.astype(np.float32)


# --------------------------------------------------------------------------
# Kernel factory: filter taps + true/padded time lengths baked in as constants
# --------------------------------------------------------------------------
def _make_activation1d_kernel(up_filter, down_filter, t_true, t_pad):
    up = [float(v) for v in np.asarray(up_filter, dtype=np.float64)]
    dn = [float(v) for v in np.asarray(down_filter, dtype=np.float64)]
    assert len(up) == 12 and len(dn) == 12, "fused op assumes 12-tap filters"

    ratio = 2.0
    # Polyphase transposed-conv coefficients (ratio folded in):
    #   e[n] = sum_r x~[n+2-r] * ce[r],   ce[r] = ratio * up[2r+1]   (even phase)
    #   o[n] = sum_r x~[n+3-r] * co[r],   co[r] = ratio * up[2r]     (odd  phase)
    ce = [ratio * up[2 * r + 1] for r in range(6)]
    co = [ratio * up[2 * r] for r in range(6)]
    # Kaiser-sinc (even length) is symmetric: dn[k] == dn[11-k] -> fold pairs.
    dn_symmetric = bool(np.allclose(np.asarray(dn), np.asarray(dn)[::-1],
                                    rtol=0.0, atol=1e-12))
    right_pad = t_pad - t_true          # lane columns holding replicated x[T-1]
    assert right_pad >= 0

    def kernel(x_ref, a_ref, ib_ref, out_ref):
        x = x_ref[...].astype(jnp.float32)                      # (R, Tp)
        rows, tp = x.shape
        lane = jax.lax.broadcasted_iota(jnp.int32, (rows, tp), 1)

        # Shared boundary masks (computed once, reused by both FIR stages).
        lmask = {k: lane < k for k in (1, 2, 3)}
        rmask_cache = {}

        def right_mask(s):
            if s not in rmask_cache:
                rmask_cache[s] = lane >= (tp - s)
            return rmask_cache[s]

        def view(v, s, left_fill, right_fill):
            # result[:, n] == clamp-extended v[:, n+s] for every column n that
            # is later consumed (n < t_true); columns >= t_true are don't-care.
            out = pltpu.roll(v, shift=(-s) % tp, axis=1) if s != 0 else v
            if s > right_pad:                 # wrapped columns can be consumed
                out = jnp.where(right_mask(s), right_fill, out)
            if s < 0:                         # wrapped left columns
                out = jnp.where(lmask[-s], left_fill, out)
            return out

        # Hoisted edge fills (JAX does not CSE broadcast_in_dim).
        x_first = jnp.broadcast_to(x[:, 0:1], (rows, tp))
        x_last = (jnp.broadcast_to(x[:, tp - 1:tp], (rows, tp))
                  if right_pad < 3 else None)   # only needed near the pad edge

        # ---- UpSample1d: stride-2 transposed conv as two polyphase FIRs ----
        e = None   # even output phase  y[2n]
        o = None   # odd  output phase  y[2n+1]
        for s in range(-3, 4):
            v = view(x, s, x_first, x_last)
            re = 2 - s
            if 0 <= re <= 5:
                term = v * ce[re]
                e = term if e is None else e + term
            ro = 3 - s
            if 0 <= ro <= 5:
                term = v * co[ro]
                o = term if o is None else o + term

        # ---- Snake / SnakeBeta (log-scale params pre-exp'd in the wrapper) --
        a = jnp.broadcast_to(a_ref[...].astype(jnp.float32), (rows, tp))
        ib = jnp.broadcast_to(ib_ref[...].astype(jnp.float32), (rows, tp))
        se = jnp.sin(e * a)
        so = jnp.sin(o * a)
        e = e + ib * (se * se)
        o = o + ib * (so * so)

        # ---- DownSample1d: replicate-pad 5/6 of the interleaved signal,
        #      stride-2 FIR:
        #   z[t] = sum_q dn[2q]*A[t+q] + dn[2q+1]*B[t+q]
        #   A[j] = clamp( o[j-3] )  with left fill y[0]=e[0], right fill y[2T-1]=o[T-1]
        #   B[j] = clamp( e[j-2] )  with the same fills.
        # Pre-clamp the tails of e/o once; shifted views then only need cheap
        # left fixes (plus a right fix only when T is within 3 of the pad).
        e0 = jnp.broadcast_to(e[:, 0:1], (rows, tp))               # y[0]
        oL = jnp.broadcast_to(o[:, t_true - 1:t_true], (rows, tp)) # y[2T-1]
        if right_pad > 0:
            tail = lane >= t_true
            P = jnp.where(tail, oL, o)      # o extended past T with y[2T-1]
            Q = jnp.where(tail, oL, e)      # e extended past T with y[2T-1]
        else:
            P, Q = o, e

        z = None
        for q in range(6):
            aq = view(P, q - 3, e0, oL)             # A[t+q]
            if dn_symmetric:
                bq = view(Q, 3 - q, e0, oL)         # B[t+5-q], same coefficient
                term = (aq + bq) * dn[2 * q]
            else:
                bq = view(Q, q - 2, e0, oL)         # B[t+q]
                term = aq * dn[2 * q] + bq * dn[2 * q + 1]
            z = term if z is None else z + term

        out_ref[...] = z.astype(out_ref.dtype)

    return kernel


# --------------------------------------------------------------------------
# Wrapper: padding, tiling heuristics, pallas_call
# --------------------------------------------------------------------------
def activation1d_pallas(x, alpha_log, beta_log, up_filter, down_filter,
                        *, max_rows_per_block=256,
                        vmem_block_budget_bytes=20 * 1024 * 1024):
    """x: [B, C, T]; alpha_log/beta_log: [C] (log-scale); filters: [12] host consts."""
    bsz, ch, t = x.shape
    bc = bsz * ch
    out_dtype = x.dtype

    # Lane-dense time axis: replicate-pad to a multiple of 128 and crop later.
    # The kernel clamps the boundary math at the true T, so the first T output
    # columns are identical to the unpadded op.
    t_pad = _round_up(max(t, 1), 128)
    x2 = x.reshape(bc, t)
    if t_pad != t:
        x2 = jnp.pad(x2, ((0, 0), (0, t_pad - t)), mode="edge")

    # Per-row snake params, computed once in plain XLA (not per grid step).
    a = jnp.exp(alpha_log.astype(jnp.float32))
    ib = 1.0 / (jnp.exp(beta_log.astype(jnp.float32)) + 1e-9)
    a2 = jnp.tile(a, (bsz,)).reshape(bc, 1)
    ib2 = jnp.tile(ib, (bsz,)).reshape(bc, 1)

    # Row tile: as large as the per-block VMEM budget allows (~16 live f32
    # row-slabs: double-buffered I/O, FIR phases, pre-clamped copies, temps).
    bytes_per_row = 16 * t_pad * 4
    bc8 = _round_up(bc, 8)
    r = max(8, (vmem_block_budget_bytes // bytes_per_row) // 8 * 8)
    r = min(r, max_rows_per_block, bc8)
    if bc8 >= 16:
        # keep >=2 grid steps so megacore (v7x: 2 TensorCores) can split rows
        r = min(r, max(8, (bc8 // 2) // 8 * 8))
    bc_pad = _round_up(bc, r)
    if bc_pad != bc:
        x2 = jnp.pad(x2, ((0, bc_pad - bc), (0, 0)), mode="edge")
        a2 = jnp.pad(a2, ((0, bc_pad - bc), (0, 0)), mode="edge")
        ib2 = jnp.pad(ib2, ((0, bc_pad - bc), (0, 0)), mode="edge")

    kernel = _make_activation1d_kernel(up_filter, down_filter,
                                       t_true=t, t_pad=t_pad)

    out = pl.pallas_call(
        kernel,
        out_shape=jax.ShapeDtypeStruct((bc_pad, t_pad), out_dtype),
        grid=(bc_pad // r,),
        in_specs=[
            pl.BlockSpec((r, t_pad), lambda i: (i, 0)),   # input rows
            pl.BlockSpec((r, 1), lambda i: (i, 0)),       # exp(alpha)
            pl.BlockSpec((r, 1), lambda i: (i, 0)),       # 1/(exp(beta)+eps)
        ],
        out_specs=pl.BlockSpec((r, t_pad), lambda i: (i, 0)),
        compiler_params=pltpu.CompilerParams(
            dimension_semantics=("parallel",),
            vmem_limit_bytes=32 * 1024 * 1024),
    )(x2, a2, ib2)

    return out[:bc, :t].reshape(bsz, ch, t)


# --------------------------------------------------------------------------
# Pure-numpy reference (direct translation of the unfused torch path)
# --------------------------------------------------------------------------
def activation1d_reference(x, alpha_log, beta_log, up_f, down_f):
    Bsz, C, T = x.shape
    out = np.zeros((Bsz, C, T), np.float32)
    for bi in range(Bsz):
        for c in range(C):
            xi = x[bi, c]
            xp = np.concatenate([np.full(5, xi[0]), xi, np.full(5, xi[-1])])
            full = np.zeros(2 * (T + 10) - 2 + 12, np.float64)
            for i in range(T + 10):
                for k in range(12):
                    full[2 * i + k] += xp[i] * up_f[k]
            up = 2.0 * full[15: 15 + 2 * T]
            a = math.exp(float(alpha_log[c]))
            bb = math.exp(float(beta_log[c]))
            y = up + (1.0 / (bb + 1e-9)) * np.sin(up * a) ** 2
            yp = np.concatenate([np.full(5, y[0]), y, np.full(6, y[-1])])
            for t in range(T):
                out[bi, c, t] = np.dot(yp[2 * t: 2 * t + 12], down_f)
    return out


if __name__ == "__main__":
    up_filter = jnp.asarray(kaiser_sinc_filter1d(0.5 / 2, 0.6 / 2, 12))
    down_filter = jnp.asarray(kaiser_sinc_filter1d(0.5 / 2, 0.6 / 2, 12))

    # Shapes exercise: (a) the small demo shape, (b) ragged rows -> row padding
    # + a 2-step grid, (c) T within 3 of the 128 pad (mixed clamp path),
    # (d) T an exact multiple of 128 (no lane padding, full right clamps).
    for (B, C, T) in [(2, 4, 16), (2, 6, 40), (1, 8, 126), (1, 8, 128)]:
        key = jax.random.PRNGKey(0)
        kx, ka, kb = jax.random.split(key, 3)
        x = jax.random.normal(kx, (B, C, T), dtype=jnp.float32)
        alpha_log = 0.1 * jax.random.normal(ka, (C,), dtype=jnp.float32)
        beta_log = 0.1 * jax.random.normal(kb, (C,), dtype=jnp.float32)

        out = activation1d_pallas(x, alpha_log, beta_log, up_filter, down_filter)
        out = jax.block_until_ready(out)

        ref = activation1d_reference(np.asarray(x), np.asarray(alpha_log),
                                     np.asarray(beta_log), np.asarray(up_filter),
                                     np.asarray(down_filter))
        np.testing.assert_allclose(np.asarray(out), ref, rtol=1e-4, atol=1e-4)

    print("KERNEL_OK")
</pallas_src>

<mosaic_0001>
module attributes {stable_mosaic.version = 11 : i64} {
  func.func @kernel(%arg0: i32, %arg1: memref<8x128xf32, #tpu.memory_space<vmem>>, %arg2: memref<8x1xf32, #tpu.memory_space<vmem>>, %arg3: memref<8x1xf32, #tpu.memory_space<vmem>>, %arg4: memref<8x128xf32, #tpu.memory_space<vmem>>) attributes {dimension_semantics = [#tpu.dimension_semantics<parallel>], iteration_bounds = array<i64: 1>, scalar_prefetch = 0 : i64, scratch_operands = 0 : i64, tpu.core_type = #tpu.core_type<tc>, window_params = [{transform_indices = @transform_0, window_bounds = array<i64: 8, 128>}, {transform_indices = @transform_1, window_bounds = array<i64: 8, 1>}, {transform_indices = @transform_2, window_bounds = array<i64: 8, 1>}, {transform_indices = @transform_3, window_bounds = array<i64: 8, 128>}]} {
    %c0 = arith.constant 0 : index
    %c0_0 = arith.constant 0 : index
    %0 = vector.load %arg1[%c0, %c0_0] : memref<8x128xf32, #tpu.memory_space<vmem>>, vector<8x128xf32>
    %1 = tpu.iota {dimensions = array<i32: 1>} : vector<8x128xi32>
    %c1_i32 = arith.constant 1 : i32
    %2 = vector.broadcast %c1_i32 : i32 to vector<8x128xi32>
    %3 = arith.cmpi slt, %1, %2 : vector<8x128xi32>
    %c2_i32 = arith.constant 2 : i32
    %4 = vector.broadcast %c2_i32 : i32 to vector<8x128xi32>
    %5 = arith.cmpi slt, %1, %4 : vector<8x128xi32>
    %c3_i32 = arith.constant 3 : i32
    %6 = vector.broadcast %c3_i32 : i32 to vector<8x128xi32>
    %7 = arith.cmpi slt, %1, %6 : vector<8x128xi32>
    %8 = vector.extract_strided_slice %0 {offsets = [0, 0], sizes = [8, 1], strides = [1, 1]} : vector<8x128xf32> to vector<8x1xf32>
    %9 = vector.shape_cast %8 : vector<8x1xf32> to vector<8x1xf32>
    %10 = vector.broadcast %9 : vector<8x1xf32> to vector<8x128xf32>
    %c3_i32_1 = arith.constant 3 : i32
    %11 = tpu.dynamic_rotate %0 by %c3_i32_1 dim 1 : vector<8x128xf32>, i32 -> vector<8x128xf32>
    %12 = arith.select %7, %10, %11 : vector<8x128xi1>, vector<8x128xf32>
    %cst = arith.constant 0.00405793311 : f32
    %13 = vector.broadcast %cst : f32 to vector<8x128xf32>
    %14 = arith.mulf %12, %13 : vector<8x128xf32>
    %c2_i32_2 = arith.constant 2 : i32
    %15 = tpu.dynamic_rotate %0 by %c2_i32_2 dim 1 : vector<8x128xf32>, i32 -> vector<8x128xf32>
    %16 = arith.select %5, %10, %15 : vector<8x128xi1>, vector<8x128xf32>
    %cst_3 = arith.constant -0.0510869287 : f32
    %17 = vector.broadcast %cst_3 : f32 to vector<8x128xf32>
    %18 = arith.mulf %16, %17 : vector<8x128xf32>
    %19 = arith.addf %14, %18 : vector<8x128xf32>
    %cst_4 = arith.constant 0.0187789276 : f32
    %20 = vector.broadcast %cst_4 : f32 to vector<8x128xf32>
    %21 = arith.mulf %16, %20 : vector<8x128xf32>
    %c1_i32_5 = arith.constant 1 : i32
    %22 = tpu.dynamic_rotate %0 by %c1_i32_5 dim 1 : vector<8x128xf32>, i32 -> vector<8x128xf32>
    %23 = arith.select %3, %10, %22 : vector<8x128xi1>, vector<8x128xf32>
    %cst_6 = arith.constant 0.257145226 : f32
    %24 = vector.broadcast %cst_6 : f32 to vector<8x128xf32>
    %25 = arith.mulf %23, %24 : vector<8x128xf32>
    %26 = arith.addf %19, %25 : vector<8x128xf32>
    %cst_7 = arith.constant -0.115314752 : f32
    %27 = vector.broadcast %cst_7 : f32 to vector<8x128xf32>
    %28 = arith.mulf %23, %27 : vector<8x128xf32>
    %29 = arith.addf %21, %28 : vector<8x128xf32>
    %cst_8 = arith.constant 0.886419594 : f32
    %30 = vector.broadcast %cst_8 : f32 to vector<8x128xf32>
    %31 = arith.mulf %0, %30 : vector<8x128xf32>
    %32 = arith.addf %26, %31 : vector<8x128xf32>
    %cst_9 = arith.constant 0.886419594 : f32
    %33 = vector.broadcast %cst_9 : f32 to vector<8x128xf32>
    %34 = arith.mulf %0, %33 : vector<8x128xf32>
    %35 = arith.addf %29, %34 : vector<8x128xf32>
    %c127_i32 = arith.constant 127 : i32
    %36 = tpu.dynamic_rotate %0 by %c127_i32 dim 1 : vector<8x128xf32>, i32 -> vector<8x128xf32>
    %cst_10 = arith.constant -0.115314752 : f32
    %37 = vector.broadcast %cst_10 : f32 to vector<8x128xf32>
    %38 = arith.mulf %36, %37 : vector<8x128xf32>
    %39 = arith.addf %32, %38 : vector<8x128xf32>
    %cst_11 = arith.constant 0.257145226 : f32
    %40 = vector.broadcast %cst_11 : f32 to vector<8x128xf32>
    %41 = arith.mulf %36, %40 : vector<8x128xf32>
    %42 = arith.addf %35, %41 : vector<8x128xf32>
    %c126_i32 = arith.constant 126 : i32
    %43 = tpu.dynamic_rotate %0 by %c126_i32 dim 1 : vector<8x128xf32>, i32 -> vector<8x128xf32>
    %cst_12 = arith.constant 0.0187789276 : f32
    %44 = vector.broadcast %cst_12 : f32 to vector<8x128xf32>
    %45 = arith.mulf %43, %44 : vector<8x128xf32>
    %46 = arith.addf %39, %45 : vector<8x128xf32>
    %cst_13 = arith.constant -0.0510869287 : f32
    %47 = vector.broadcast %cst_13 : f32 to vector<8x128xf32>
    %48 = arith.mulf %43, %47 : vector<8x128xf32>
    %49 = arith.addf %42, %48 : vector<8x128xf32>
    %c125_i32 = arith.constant 125 : i32
    %50 = tpu.dynamic_rotate %0 by %c125_i32 dim 1 : vector<8x128xf32>, i32 -> vector<8x128xf32>
    %cst_14 = arith.constant 0.00405793311 : f32
    %51 = vector.broadcast %cst_14 : f32 to vector<8x128xf32>
    %52 = arith.mulf %50, %51 : vector<8x128xf32>
    %53 = arith.addf %49, %52 : vector<8x128xf32>
    %c0_15 = arith.constant 0 : index
    %c0_16 = arith.constant 0 : index
    %54 = vector.load %arg2[%c0_15, %c0_16] : memref<8x1xf32, #tpu.memory_space<vmem>>, vector<8x1xf32>
    %55 = vector.shape_cast %54 : vector<8x1xf32> to vector<8x1xf32>
    %56 = vector.broadcast %55 : vector<8x1xf32> to vector<8x128xf32>
    %c0_17 = arith.constant 0 : index
    %c0_18 = arith.constant 0 : index
    %57 = vector.load %arg3[%c0_17, %c0_18] : memref<8x1xf32, #tpu.memory_space<vmem>>, vector<8x1xf32>
    %58 = vector.shape_cast %57 : vector<8x1xf32> to vector<8x1xf32>
    %59 = vector.broadcast %58 : vector<8x1xf32> to vector<8x128xf32>
    %60 = arith.mulf %46, %56 : vector<8x128xf32>
    %61 = math.sin %60 : vector<8x128xf32>
    %62 = arith.mulf %53, %56 : vector<8x128xf32>
    %63 = math.sin %62 : vector<8x128xf32>
    %64 = arith.mulf %61, %61 : vector<8x128xf32>
    %65 = arith.mulf %59, %64 : vector<8x128xf32>
    %66 = arith.addf %46, %65 : vector<8x128xf32>
    %67 = arith.mulf %63, %63 : vector<8x128xf32>
    %68 = arith.mulf %59, %67 : vector<8x128xf32>
    %69 = arith.addf %53, %68 : vector<8x128xf32>
    %70 = vector.extract_strided_slice %66 {offsets = [0, 0], sizes = [8, 1], strides = [1, 1]} : vector<8x128xf32> to vector<8x1xf32>
    %71 = vector.shape_cast %70 : vector<8x1xf32> to vector<8x1xf32>
    %72 = vector.broadcast %71 : vector<8x1xf32> to vector<8x128xf32>
    %73 = vector.extract_strided_slice %69 {offsets = [0, 15], sizes = [8, 1], strides = [1, 1]} : vector<8x128xf32> to vector<8x1xf32>
    %74 = vector.shape_cast %73 : vector<8x1xf32> to vector<8x1xf32>
    %75 = vector.broadcast %74 : vector<8x1xf32> to vector<8x128xf32>
    %c16_i32 = arith.constant 16 : i32
    %76 = vector.broadcast %c16_i32 : i32 to vector<8x128xi32>
    %77 = arith.cmpi sge, %1, %76 : vector<8x128xi32>
    %78 = arith.select %77, %75, %69 : vector<8x128xi1>, vector<8x128xf32>
    %79 = arith.select %77, %75, %66 : vector<8x128xi1>, vector<8x128xf32>
    %c3_i32_19 = arith.constant 3 : i32
    %80 = tpu.dynamic_rotate %78 by %c3_i32_19 dim 1 : vector<8x128xf32>, i32 -> vector<8x128xf32>
    %81 = arith.select %7, %72, %80 : vector<8x128xi1>, vector<8x128xf32>
    %c125_i32_20 = arith.constant 125 : i32
    %82 = tpu.dynamic_rotate %79 by %c125_i32_20 dim 1 : vector<8x128xf32>, i32 -> vector<8x128xf32>
    %83 = arith.addf %81, %82 : vector<8x128xf32>
    %cst_21 = arith.constant 0.00202896656 : f32
    %84 = vector.broadcast %cst_21 : f32 to vector<8x128xf32>
    %85 = arith.mulf %83, %84 : vector<8x128xf32>
    %c2_i32_22 = arith.constant 2 : i32
    %86 = tpu.dynamic_rotate %78 by %c2_i32_22 dim 1 : vector<8x128xf32>, i32 -> vector<8x128xf32>
    %87 = arith.select %5, %72, %86 : vector<8x128xi1>, vector<8x128xf32>
    %c126_i32_23 = arith.constant 126 : i32
    %88 = tpu.dynamic_rotate %79 by %c126_i32_23 dim 1 : vector<8x128xf32>, i32 -> vector<8x128xf32>
    %89 = arith.addf %87, %88 : vector<8x128xf32>
    %cst_24 = arith.constant -0.0255434643 : f32
    %90 = vector.broadcast %cst_24 : f32 to vector<8x128xf32>
    %91 = arith.mulf %89, %90 : vector<8x128xf32>
    %92 = arith.addf %85, %91 : vector<8x128xf32>
    %c1_i32_25 = arith.constant 1 : i32
    %93 = tpu.dynamic_rotate %78 by %c1_i32_25 dim 1 : vector<8x128xf32>, i32 -> vector<8x128xf32>
    %94 = arith.select %3, %72, %93 : vector<8x128xi1>, vector<8x128xf32>
    %c127_i32_26 = arith.constant 127 : i32
    %95 = tpu.dynamic_rotate %79 by %c127_i32_26 dim 1 : vector<8x128xf32>, i32 -> vector<8x128xf32>
    %96 = arith.addf %94, %95 : vector<8x128xf32>
    %cst_27 = arith.constant 0.128572613 : f32
    %97 = vector.broadcast %cst_27 : f32 to vector<8x128xf32>
    %98 = arith.mulf %96, %97 : vector<8x128xf32>
    %99 = arith.addf %92, %98 : vector<8x128xf32>
    %100 = arith.addf %78, %79 : vector<8x128xf32>
    %cst_28 = arith.constant 0.443209797 : f32
    %101 = vector.broadcast %cst_28 : f32 to vector<8x128xf32>
    %102 = arith.mulf %100, %101 : vector<8x128xf32>
    %103 = arith.addf %99, %102 : vector<8x128xf32>
    %c127_i32_29 = arith.constant 127 : i32
    %104 = tpu.dynamic_rotate %78 by %c127_i32_29 dim 1 : vector<8x128xf32>, i32 -> vector<8x128xf32>
    %c1_i32_30 = arith.constant 1 : i32
    %105 = tpu.dynamic_rotate %79 by %c1_i32_30 dim 1 : vector<8x128xf32>, i32 -> vector<8x128xf32>
    %106 = arith.select %3, %72, %105 : vector<8x128xi1>, vector<8x128xf32>
    %107 = arith.addf %104, %106 : vector<8x128xf32>
    %cst_31 = arith.constant -0.0576573759 : f32
    %108 = vector.broadcast %cst_31 : f32 to vector<8x128xf32>
    %109 = arith.mulf %107, %108 : vector<8x128xf32>
    %110 = arith.addf %103, %109 : vector<8x128xf32>
    %c126_i32_32 = arith.constant 126 : i32
    %111 = tpu.dynamic_rotate %78 by %c126_i32_32 dim 1 : vector<8x128xf32>, i32 -> vector<8x128xf32>
    %c2_i32_33 = arith.constant 2 : i32
    %112 = tpu.dynamic_rotate %79 by %c2_i32_33 dim 1 : vector<8x128xf32>, i32 -> vector<8x128xf32>
    %113 = arith.select %5, %72, %112 : vector<8x128xi1>, vector<8x128xf32>
    %114 = arith.addf %111, %113 : vector<8x128xf32>
    %cst_34 = arith.constant 0.00938946381 : f32
    %115 = vector.broadcast %cst_34 : f32 to vector<8x128xf32>
    %116 = arith.mulf %114, %115 : vector<8x128xf32>
    %117 = arith.addf %110, %116 : vector<8x128xf32>
    %c0_35 = arith.constant 0 : index
    %c0_36 = arith.constant 0 : index
    %118 = vector.load %arg4[%c0_35, %c0_36] : memref<8x128xf32, #tpu.memory_space<vmem>>, vector<8x128xf32>
    tpu.vector_store %arg4[%c0_35, %c0_36], %117 {strides = array<i32>} : memref<8x128xf32, #tpu.memory_space<vmem>>, vector<8x128xf32>,
    return
  }
  func.func @transform_0(%arg0: i32) -> (i32, i32) {
    %c0_i32 = arith.constant 0 : i32
    %c0_i32_0 = arith.constant 0 : i32
    return %arg0, %c0_i32 : i32, i32
  }
  func.func @transform_1(%arg0: i32) -> (i32, i32) {
    %c0_i32 = arith.constant 0 : i32
    %c0_i32_0 = arith.constant 0 : i32
    return %arg0, %c0_i32 : i32, i32
  }
  func.func @transform_2(%arg0: i32) -> (i32, i32) {
    %c0_i32 = arith.constant 0 : i32
    %c0_i32_0 = arith.constant 0 : i32
    return %arg0, %c0_i32 : i32, i32
  }
  func.func @transform_3(%arg0: i32) -> (i32, i32) {
    %c0_i32 = arith.constant 0 : i32
    %c0_i32_0 = arith.constant 0 : i32
    return %arg0, %c0_i32 : i32, i32
  }
}

</mosaic_0001>

<llo_original>
// kernel: tpu_custom_call.1
$region0: #{tpu_custom_call.1}
  #allocation0 [shape = 'u32[]', space=smem, size = 0x4, offset = 0x4, fixed_abs, tag = 'smem constant byte address 0x4 - core index']
  #allocation1 [shape = 'u32[144,128]{1,0:T(1,128)}', space=vmem, size = 0x12000, scoped, tag = 'internal scratch']
  %s0 = inlined_call_operand.vmem [shape: f32[8,128], index: 0, kind: input, shape index: {}]
  %s1 = inlined_call_operand.vmem [shape: f32[8,1], index: 1, kind: input, shape index: {}]
  %s2 = inlined_call_operand.vmem [shape: f32[8,1], index: 2, kind: input, shape index: {}]
  %s3 = inlined_call_operand.hbm [shape: f32[8,128], index: 3, kind: output, shape index: {}]
  %s4 = sld [smem:[#allocation0]]
  $region22: #{tpu_custom_call.1} parent=0
    _
  %s6 = ssub.s32 1, %s4
  %s7 = scalar_select 0, %s6, %s4
  $region1: #{tpu_custom_call.1} parent=0
    #allocation2 [shape = 'u8[4096]{0}', space=vmem, size = 0x1000, scoped, tag = 'output window, operand 0, single buffered']
    #allocation3 [shape = 's32[1]{0}', space=sflag, size = 0x4, scoped, tag = 'scoped memory for tpu_custom_call.1']
    %8 = vsyncpa [#allocation3], 0
    // Predicated region
    $region2: #{tpu_custom_call.1} parent=1 // pred_check
      _
    $region3: #{tpu_custom_call.1} parent=1 // pred_check_branch
      %10 = sbr.rel (0) target = $region5
    $region4: #{tpu_custom_call.1} parent=1 // pred_region
      _
    $region5: #{tpu_custom_call.1} parent=1 // pred_fallthru
      _
    // Predicated region
    $region6: #{tpu_custom_call.1} parent=1 // pred_check
      _
    $region7: #{tpu_custom_call.1} parent=1 // pred_check_branch
      %12 = sbr.rel (0) target = $region9
    $region8: #{tpu_custom_call.1} parent=1 // pred_region
      _
    $region9: #{tpu_custom_call.1} parent=1 // pred_fallthru
      _
    // Predicated region
    $region10: #{tpu_custom_call.1} parent=1 // pred_check
      _
    $region11: #{tpu_custom_call.1} parent=1 // pred_check_branch
      %14 = sbr.rel (0) target = $region13
    $region12: #{tpu_custom_call.1} parent=1 // pred_region
      _
    $region13: #{tpu_custom_call.1} parent=1 // pred_fallthru
      _
    %v15 = vld [vmem:[%s0] sm:$0xff]
    %v16 = vlaneseq
    %v17 = vand.u32 %v16, 127
    %vm18 = vcmp.lt.s32.totalorder %v17, 1
    %vm19 = vcmp.lt.s32.totalorder %v17, 2
    %vm20 = vcmp.lt.s32.totalorder %v17, 3
    %22 = vset.pattern.permute.xlu0 0
    %23 = vperm.xlu0 %22, %v15
    %v24 = vpop.permute.xlu0 %23
    %26 = vrot.lane.b32.xlu0 %v15, 3
    %v27 = vpop.permute.xlu0 %26
    %v28 = vsel %vm20, %v24, %v27
    %v29 = vmul.f32 %v28, 0.004057933
    %30 = vrot.lane.b32.xlu0 %v15, 2
    %v31 = vpop.permute.xlu0 %30
    %v32 = vsel %vm19, %v24, %v31
    %v33 = vmul.f32 %v32, -0.05108693
    %v34 = vadd.f32 %v29, %v33
    %v35 = vmul.f32 %v32, 0.018778928
    %36 = vrot.lane.b32.xlu0 %v15, 1
    %v37 = vpop.permute.xlu0 %36
    %v38 = vsel %vm18, %v24, %v37
    %v39 = vmul.f32 %v38, 0.25714523
    %v40 = vadd.f32 %v34, %v39
    %v41 = vmul.f32 %v38, -0.11531475
    %v42 = vadd.f32 %v35, %v41
    %v43 = vmul.f32 %v15, 0.8864196
    %v44 = vadd.f32 %v40, %v43
    %v45 = vadd.f32 %v42, %v43
    %46 = vrot.lane.b32.xlu0 %v15, 127
    %v47 = vpop.permute.xlu0 %46
    %v48 = vmul.f32 %v47, -0.11531475
    %v49 = vadd.f32 %v44, %v48
    %v50 = vmul.f32 %v47, 0.25714523
    %v51 = vadd.f32 %v45, %v50
    %52 = vrot.lane.b32.xlu0 %v15, 126
    %v53 = vpop.permute.xlu0 %52
    %v54 = vmul.f32 %v53, 0.018778928
    %v55 = vadd.f32 %v49, %v54
    %v56 = vmul.f32 %v53, -0.05108693
    %v57 = vadd.f32 %v51, %v56
    %58 = vrot.lane.b32.xlu0 %v15, 125
    %v59 = vpop.permute.xlu0 %58
    %v60 = vmul.f32 %v59, 0.004057933
    %v61 = vadd.f32 %v57, %v60
    %v62 = vld [vmem:[%s1] sm:$0xff]
    %64 = vset.pattern.permute.xlu0 0
    %65 = vperm.xlu0 %64, %v62
    %v66 = vpop.permute.xlu0 %65
    %v68 = vld [vmem:[%s2] sm:$0xff]
    %70 = vset.pattern.permute.xlu0 0
    %71 = vperm.xlu0 %70, %v68
    %v72 = vpop.permute.xlu0 %71
    %v74 = vmul.f32 %v55, %v66
    %v75 = vand.u32 2147483647, %v74
    %vm76 = vcmp.le.f32.partialorder %v75, 0.7853982
    %vm77 = vcmp.lt.s32.totalorder %v74, 0
    %v78 = vand.u32 %v74, 2139095040
    %v79 = vshrl.u32 %v78, 23
    %v80 = vsub.s32 %v79, 127
    %v81 = vand.u32 2147483647, %v74
    %v82 = vand.u32 %v81, 8388607
    %v83 = vor.u32 %v82, 8388608
    %v84 = vsub.s32 0, %v83
    %v85 = vadd.s32 %v80, 1
    %vm86 = vcmp.gt.s32.totalorder %v85, 0
    %v87 = vsel %vm86, %v85, 0
    %v88 = vshrl.u32 %v87, 5
    %v89 = vand.u32 %v87, 31
    %v90 = vsub.s32 32, %v89
    %v91 = vshrl.u32 683565275, %v90
    %v92 = vshll.u32 683565275, %v89
    %v93 = vshrl.u32 2475754826, %v90
    %v94 = vor.u32 %v92, %v93
    %v95 = vshll.u32 2475754826, %v89
    %v96 = vshrl.u32 2131351028, %v90
    %v97 = vor.u32 %v95, %v96
    %v98 = vshll.u32 2131351028, %v89
    %v99 = vshrl.u32 2102212464, %v90
    %v100 = vor.u32 %v98, %v99
    %v101 = vshll.u32 2102212464, %v89
    %v102 = vshrl.u32 920167782, %v90
    %v103 = vor.u32 %v101, %v102
    %v104 = vshll.u32 920167782, %v89
    %v105 = vshrl.u32 1326507024, %v90
    %v106 = vor.u32 %v104, %v105
    %vm107 = vcmp.lt.s32.totalorder %v88, 1
    %vm108 = vcmp.lt.s32.totalorder %v88, 2
    %vm109 = vcmp.lt.s32.totalorder %v88, 3
    %vm110 = vcmp.lt.s32.totalorder %v88, 4
    %v111 = vsel %vm107, %v91, %v94
    %v112 = vsel %vm110, %v100, 2102212464
    %v113 = vsel %vm109, %v97, %v112
    %v114 = vsel %vm108, %v111, %v113
    %v115 = vsel %vm107, %v94, %v97
    %v116 = vsel %vm110, %v103, 920167782
    %v117 = vsel %vm109, %v100, %v116
    %v118 = vsel %vm108, %v115, %v117
    %v119 = vsel %vm107, %v97, %v100
    %v120 = vsel %vm110, %v106, 1326507024
    %v121 = vsel %vm109, %v103, %v120
    %v122 = vsel %vm108, %v119, %v121
    %v123 = vshll.u32 %v83, 8
    %v124 = vmul.u32.u64.compose %v123, %v122
    %v125 = vextract.low.u32 %v124
    %v126 = vextract.high.u32 %v124
    %v127 = vmul.u32.u64.compose %v123, %v118
    %v128 = vextract.low.u32 %v127
    %v129 = vextract.high.u32 %v127
    %v130 = vmul.u32 %v123, %v114
    %v131 = vadd.s32 %v126, %v128
    %vm132 = vc.u32 %v126, %v128
    %v133 = vadd.s32 %v129, 1
    %v134 = vsel %vm132, %v133, %v129
    %v135 = vadd.s32 %v130, %v134
    %v136 = vadd.s32 %v135, 536870912
    %v137 = vshrl.u32 %v136, 30
    %v138 = vshll.u32 %v137, 30
    %v139 = vsub.s32 %v135, %v138
    %vm140 = vcmp.lt.s32.totalorder %v139, 0
    %v141 = vsub.s32 0, %v139
    %v142 = vsel %vm140, %v141, %v139
    %v143 = vclz %v142
    %v144 = vsub.s32 %v143, 2
    %vm145 = vcmp.gt.s32.totalorder 0, %v144
    %v146 = vsel %vm145, 0, %v144
    %v147 = vsub.s32 32, %v146
    %v148 = vshll.u32 %v139, %v146
    %v149 = vshrl.u32 %v131, %v147
    %v150 = vor.u32 %v148, %v149
    %v151 = vsub.s32 4294967266, %v146
    %v152 = vadd.s32 %v151, 127
    %v153 = vshll.u32 %v152, 23
    %v154 = vor.u32 4788187, %v153
    %v155 = vand.u32 2147483647, %v154
    %v157 = vcvt.s32.f32 %v150
    %v158 = vmul.f32 %v157, %v155
    %v159 = vxor.u32 %v158, 2147483648
    %v160 = vsel %vm77, %v159, %v158
    %v161 = vsub.s32 4, %v137
    %v162 = vsel %vm77, %v161, %v137
    %v163 = vsel %vm76, %v74, %v160
    %v164 = vsel %vm76, 0, %v162
    %v165 = vcosq.f32.pop %v163
    %v166 = vsinq.f32.pop %v163
    %vm167 = vweird.f32 %v74
    %v168 = vadd.s32 %v164, 3
    %v169 = vand.u32 %v168, 3
    %vm170 = vcmp.lt.s32.totalorder %v169, 2
    %vm171 = vcmp.eq.s32.totalorder %v169, 0
    %v172 = vxor.u32 %v166, 2147483648
    %v173 = vsel %vm171, %v165, %v172
    %vm174 = vcmp.eq.s32.totalorder %v169, 2
    %v175 = vxor.u32 %v165, 2147483648
    %v176 = vsel %vm174, %v175, %v166
    %v177 = vsel %vm170, %v173, %v176
    %v178 = vsel %vm167, nan, %v177
    %v179 = vmul.f32 %v61, %v66
    %v180 = vand.u32 2147483647, %v179
    %vm181 = vcmp.le.f32.partialorder %v180, 0.7853982
    %vm182 = vcmp.lt.s32.totalorder %v179, 0
    %v183 = vand.u32 %v179, 2139095040
    %v184 = vshrl.u32 %v183, 23
    %v185 = vsub.s32 %v184, 127
    %v186 = vand.u32 2147483647, %v179
    %v187 = vand.u32 %v186, 8388607
    %v188 = vor.u32 %v187, 8388608
    %v189 = vsub.s32 0, %v188
    %v190 = vadd.s32 %v185, 1
    %vm191 = vcmp.gt.s32.totalorder %v190, 0
    %v192 = vsel %vm191, %v190, 0
    %v193 = vshrl.u32 %v192, 5
    %v194 = vand.u32 %v192, 31
    %v195 = vsub.s32 32, %v194
    %v196 = vshrl.u32 683565275, %v195
    %v197 = vshll.u32 683565275, %v194
    %v198 = vshrl.u32 2475754826, %v195
    %v199 = vor.u32 %v197, %v198
    %v200 = vshll.u32 2475754826, %v194
    %v201 = vshrl.u32 2131351028, %v195
    %v202 = vor.u32 %v200, %v201
    %v203 = vshll.u32 2131351028, %v194
    %v204 = vshrl.u32 2102212464, %v195
    %v205 = vor.u32 %v203, %v204
    %v206 = vshll.u32 2102212464, %v194
    %v207 = vshrl.u32 920167782, %v195
    %v208 = vor.u32 %v206, %v207
    %v209 = vshll.u32 920167782, %v194
    %v210 = vshrl.u32 1326507024, %v195
    %v211 = vor.u32 %v209, %v210
    %vm212 = vcmp.lt.s32.totalorder %v193, 1
    %vm213 = vcmp.lt.s32.totalorder %v193, 2
    %vm214 = vcmp.lt.s32.totalorder %v193, 3
    %vm215 = vcmp.lt.s32.totalorder %v193, 4
    %v216 = vsel %vm212, %v196, %v199
    %v217 = vsel %vm215, %v205, 2102212464
    %v218 = vsel %vm214, %v202, %v217
    %v219 = vsel %vm213, %v216, %v218
    %v220 = vsel %vm212, %v199, %v202
    %v221 = vsel %vm215, %v208, 920167782
    %v222 = vsel %vm214, %v205, %v221
    %v223 = vsel %vm213, %v220, %v222
    %v224 = vsel %vm212, %v202, %v205
    %v225 = vsel %vm215, %v211, 1326507024
    %v226 = vsel %vm214, %v208, %v225
    %v227 = vsel %vm213, %v224, %v226
    %v228 = vshll.u32 %v188, 8
    %v229 = vmul.u32.u64.compose %v228, %v227
    %v230 = vextract.low.u32 %v229
    %v231 = vextract.high.u32 %v229
    %v232 = vmul.u32.u64.compose %v228, %v223
    %v233 = vextract.low.u32 %v232
    %v234 = vextract.high.u32 %v232
    %v235 = vmul.u32 %v228, %v219
    %v236 = vadd.s32 %v231, %v233
    %vm237 = vc.u32 %v231, %v233
    %v238 = vadd.s32 %v234, 1
    %v239 = vsel %vm237, %v238, %v234
    %v240 = vadd.s32 %v235, %v239
    %v241 = vadd.s32 %v240, 536870912
    %v242 = vshrl.u32 %v241, 30
    %v243 = vshll.u32 %v242, 30
    %v244 = vsub.s32 %v240, %v243
    %vm245 = vcmp.lt.s32.totalorder %v244, 0
    %v246 = vsub.s32 0, %v244
    %v247 = vsel %vm245, %v246, %v244
    %v248 = vclz %v247
    %v249 = vsub.s32 %v248, 2
    %vm250 = vcmp.gt.s32.totalorder 0, %v249
    %v251 = vsel %vm250, 0, %v249
    %v252 = vsub.s32 32, %v251
    %v253 = vshll.u32 %v244, %v251
    %v254 = vshrl.u32 %v236, %v252
    %v255 = vor.u32 %v253, %v254
    %v256 = vsub.s32 4294967266, %v251
    %v257 = vadd.s32 %v256, 127
    %v258 = vshll.u32 %v257, 23
    %v259 = vor.u32 4788187, %v258
    %v260 = vand.u32 2147483647, %v259
    %v262 = vcvt.s32.f32 %v255
    %v263 = vmul.f32 %v262, %v260
    %v264 = vxor.u32 %v263, 2147483648
    %v265 = vsel %vm182, %v264, %v263
    %v266 = vsub.s32 4, %v242
    %v267 = vsel %vm182, %v266, %v242
    %v268 = vsel %vm181, %v179, %v265
    %v269 = vsel %vm181, 0, %v267
    %v270 = vcosq.f32.pop %v268
    %v271 = vsinq.f32.pop %v268
    %vm272 = vweird.f32 %v179
    %v273 = vadd.s32 %v269, 3
    %v274 = vand.u32 %v273, 3
    %vm275 = vcmp.lt.s32.totalorder %v274, 2
    %vm276 = vcmp.eq.s32.totalorder %v274, 0
    %v277 = vxor.u32 %v271, 2147483648
    %v278 = vsel %vm276, %v270, %v277
    %vm279 = vcmp.eq.s32.totalorder %v274, 2
    %v280 = vxor.u32 %v270, 2147483648
    %v281 = vsel %vm279, %v280, %v271
    %v282 = vsel %vm275, %v278, %v281
    %v283 = vsel %vm272, nan, %v282
    %v284 = vmul.f32 %v178, %v178
    %v285 = vmul.f32 %v72, %v284
    %v286 = vadd.f32 %v55, %v285
    %v287 = vmul.f32 %v283, %v283
    %v288 = vmul.f32 %v72, %v287
    %v289 = vadd.f32 %v61, %v288
    %291 = vset.pattern.permute.xlu0 0
    %292 = vperm.xlu0 %291, %v286
    %v293 = vpop.permute.xlu0 %292
    %296 = vset.pattern.permute.xlu0 15
    %297 = vperm.xlu0 %296, %v289
    %v298 = vpop.permute.xlu0 %297
    %vm300 = vcmp.ge.s32.totalorder %v17, 16
    %v301 = vsel %vm300, %v298, %v289
    %v302 = vsel %vm300, %v298, %v286
    %303 = vrot.lane.b32.xlu0 %v301, 3
    %v304 = vpop.permute.xlu0 %303
    %v305 = vsel %vm20, %v293, %v304
    %306 = vrot.lane.b32.xlu0 %v302, 125
    %v307 = vpop.permute.xlu0 %306
    %v308 = vadd.f32 %v305, %v307
    %v309 = vmul.f32 %v308, 0.0020289666
    %310 = vrot.lane.b32.xlu0 %v301, 2
    %v311 = vpop.permute.xlu0 %310
    %v312 = vsel %vm19, %v293, %v311
    %313 = vrot.lane.b32.xlu0 %v302, 126
    %v314 = vpop.permute.xlu0 %313
    %v315 = vadd.f32 %v312, %v314
    %v316 = vmul.f32 %v315, -0.025543464
    %v317 = vadd.f32 %v309, %v316
    %318 = vrot.lane.b32.xlu0 %v301, 1
    %v319 = vpop.permute.xlu0 %318
    %v320 = vsel %vm18, %v293, %v319
    %321 = vrot.lane.b32.xlu0 %v302, 127
    %v322 = vpop.permute.xlu0 %321
    %v323 = vadd.f32 %v320, %v322
    %v324 = vmul.f32 %v323, 0.12857261
    %v325 = vadd.f32 %v317, %v324
    %v326 = vadd.f32 %v301, %v302
    %v327 = vmul.f32 %v326, 0.4432098
    %v328 = vadd.f32 %v325, %v327
    %329 = vrot.lane.b32.xlu0 %v301, 127
    %v330 = vpop.permute.xlu0 %329
    %331 = vrot.lane.b32.xlu0 %v302, 1
    %v332 = vpop.permute.xlu0 %331
    %v333 = vsel %vm18, %v293, %v332
    %v334 = vadd.f32 %v330, %v333
    %v335 = vmul.f32 %v334, -0.057657376
    %v336 = vadd.f32 %v328, %v335
    %337 = vrot.lane.b32.xlu0 %v301, 126
    %v338 = vpop.permute.xlu0 %337
    %339 = vrot.lane.b32.xlu0 %v302, 2
    %v340 = vpop.permute.xlu0 %339
    %v341 = vsel %vm19, %v293, %v340
    %v342 = vadd.f32 %v338, %v341
    %v343 = vmul.f32 %v342, 0.009389464
    %v344 = vadd.f32 %v336, %v343
    %345 = vst [vmem:[#allocation2] sm:$0xff] %v344
    // Predicated region
    $region14: #{tpu_custom_call.1} parent=1 // pred_check
      _
    $region15: #{tpu_custom_call.1} parent=1 // pred_check_branch
      %347 = sbr.rel (0) target = $region17
    $region16: #{tpu_custom_call.1} parent=1 // pred_region
      %s349 = ssub.s32 128, 128
      %350 = vsyncadd [#allocation3], %s349
      %s352 = sshll.u32 [#allocation2], 4
      %s353 = int_to_ptr.vmem [resolvable:$true] %s352
      %355 = dma.vmem_to_hbm [thread:$0]  %s353, 128, %s3, [#allocation3]
    $region17: #{tpu_custom_call.1} parent=1 // pred_fallthru
      _
    // Predicated region
    $region18: #{tpu_custom_call.1} parent=1 // pred_check
      _
    $region19: #{tpu_custom_call.1} parent=1 // pred_check_branch
      %357 = sbr.rel (0) target = $region21
    $region20: #{tpu_custom_call.1} parent=1 // pred_region
      %358 = dma.done [#allocation3], 128
    $region21: #{tpu_custom_call.1} parent=1 // pred_fallthru
      _
    %359 = vsyncpa [#allocation3], 1

</llo_original>
